<compile_context>
chip_gen: v7x
topology: tpu7x:2x2x1
jax: 0.10.0
libtpu: 0.0.40
codegen_flags: <defaults>
</compile_context>

<pallas_src>
import functools
import math

import jax
import jax.numpy as jnp
from jax import lax
from jax.experimental import pallas as pl
from jax.experimental.pallas import tpu as pltpu


def _tpu_vmem_bytes():
    """Physical VMEM per TensorCore, with a conservative fallback."""
    try:
        info = pltpu.get_tpu_info()
        return int(getattr(info, "vmem_capacity_bytes", 64 * 2 ** 20))
    except Exception:
        return 64 * 2 ** 20          # v7x-sized conservative fallback


def _auto_matmul_dtype():
    """bf16 matmul operands on v6e/v7x (f32 accumulation), f32 otherwise."""
    try:
        kind = jax.devices()[0].device_kind.lower()
    except Exception:
        kind = ""
    if ("v6" in kind) or ("v7" in kind) or ("7x" in kind):
        return jnp.bfloat16
    return None


def _output_process_kernel(x_ref, w1_ref, b1_ref, g_ref, beta_ref,
                           w2_ref, b2_ref, o_ref, *,
                           n_batch, inv_d, eps, approximate_gelu):
    """One T tile: dense -> GELU -> LayerNorm -> poseFinal -> fused permute."""
    md = w1_ref.dtype                      # matmul operand dtype (f32 or bf16)
    f32 = jnp.float32

    # Hoist constant loads / casts out of the per-batch loop.
    w1 = w1_ref[...]
    w2 = w2_ref[...]
    b1 = b1_ref[...].astype(f32)
    b2 = b2_ref[...].astype(f32)
    gamma = g_ref[...].astype(f32)
    beta = beta_ref[...].astype(f32)
    inv_sqrt2 = 1.0 / math.sqrt(2.0)

    # TODO(synk): for large batch B, move `b` into the grid instead of a
    # static unroll (keeps code size and live ranges bounded).
    for b in range(n_batch):
        x_b = x_ref[:, b, :].astype(md)                              # (tt, D)

        # dense: Linear(D, D) with f32 accumulation on the MXU.
        h = jnp.dot(x_b, w1, preferred_element_type=f32) + b1        # (tt, D)

        if approximate_gelu:
            # tanh approximation rides the EUP slot (v5e VALU relief).
            h = jax.nn.gelu(h, approximate=True)
        else:
            # exact erf-based GELU, matching PyTorch F.gelu default.
            h = 0.5 * h * (1.0 + lax.erf(h * inv_sqrt2))

        # LayerNorm(eps=1e-12), single-pass statistics, f32.
        s = jnp.sum(h, axis=-1, keepdims=True)
        s2 = jnp.sum(h * h, axis=-1, keepdims=True)
        mean = s * inv_d
        var = jnp.maximum(s2 * inv_d - mean * mean, 0.0)
        h = (h - mean) * lax.rsqrt(var + eps)
        h = h * gamma + beta

        # poseFinal: Linear(D, F).
        o_b = jnp.dot(h.astype(md), w2, preferred_element_type=f32) + b2

        # Fused permute(1, 2, 0): store (F, tt) so the output lane dim is the
        # (lane-dense) T tile — no post-kernel transpose pass over HBM.
        o_ref[b, :, :] = o_b.T.astype(o_ref.dtype)


def output_process_bert(hidden_states, params, *, tt=256, matmul_dtype="auto",
                        approximate_gelu=False, stream_buffers=2):
    """hidden_states: [T, B, D] -> output: [B, out_feats, T].

    tt:              target T tile (multiple of 128 when T is tiled).
    matmul_dtype:    "auto" -> bf16 operands on v6e/v7x, f32 otherwise;
                     None / jnp.float32 -> exact f32; or an explicit dtype.
    approximate_gelu:use tanh GELU (EUP) instead of the exact erf form.
    stream_buffers:  pipeline depth of the streamed x tile.
    """
    T, B, D = hidden_states.shape
    w1, b1 = params["w1"], params["b1"]
    gamma, beta = params["gamma"], params["beta"]
    w2, b2 = params["w2"], params["b2"]
    F_out = w2.shape[1]

    if matmul_dtype == "auto":
        matmul_dtype = _auto_matmul_dtype()
    if matmul_dtype is not None:
        w1 = w1.astype(matmul_dtype)
        w2 = w2.astype(matmul_dtype)

    x_bytes = jnp.dtype(hidden_states.dtype).itemsize
    o_bytes = x_bytes
    w_bytes = jnp.dtype(w1.dtype).itemsize

    vmem_cap = int(0.85 * _tpu_vmem_bytes())

    def vmem_need(t):
        return int(stream_buffers * t * B * D * x_bytes          # streamed x tiles
                   + 2 * B * F_out * t * o_bytes                 # streamed out tiles
                   + (D * D + D * F_out) * w_bytes               # 1-buffered weights
                   + 4 * (3 * D + F_out)                         # biases / LN params
                   + 4 * t * (4 * D + 2 * F_out))                # f32 intermediates

    # T tile: full T for short sequences (lane dim == full array dim is
    # allowed); otherwise a multiple of 128 with >=2 grid steps (megacore on
    # v7x) that auto-shrinks until it fits the chip's VMEM.
    tiled = T >= 256
    if tiled:
        tt_eff = max(128, (min(tt, T // 2) // 128) * 128)
        while tt_eff > 128 and vmem_need(tt_eff) > vmem_cap:
            tt_eff -= 128
    else:
        tt_eff = T

    grid = (pl.cdiv(T, tt_eff),)
    vmem_limit = int(min(vmem_cap, max(32 * 2 ** 20, 2 * vmem_need(tt_eff))))

    rows = grid[0] * tt_eff * B
    cost = pl.CostEstimate(
        flops=int(2 * rows * D * (D + F_out)),
        transcendentals=int(rows * D),
        bytes_accessed=int(rows * D * x_bytes + B * F_out * T * o_bytes
                           + (D * D + D * F_out) * w_bytes
                           + 4 * (3 * D + F_out)),
    )

    def const_spec(shape):
        # Single-buffered constants: loaded once, no per-step DMA, half the
        # constant VMEM footprint (matters on v7x's 64 MiB VMEM).
        return pl.BlockSpec(shape, lambda i: tuple(0 for _ in shape),
                            pipeline_mode=pl.Buffered(1))

    kernel = functools.partial(
        _output_process_kernel,
        n_batch=B, inv_d=1.0 / D, eps=1e-12,
        approximate_gelu=approximate_gelu,
    )

    out = pl.pallas_call(
        kernel,
        out_shape=jax.ShapeDtypeStruct((B, F_out, T), hidden_states.dtype),
        grid_spec=pltpu.PrefetchScalarGridSpec(
            num_scalar_prefetch=0,
            grid=grid,
            in_specs=[
                pl.BlockSpec((tt_eff, B, D), lambda i: (i, 0, 0),
                             pipeline_mode=pl.Buffered(stream_buffers)),
                const_spec((D, D)),        # dense weight (in, out)
                const_spec((1, D)),        # dense bias
                const_spec((1, D)),        # LN gamma
                const_spec((1, D)),        # LN beta
                const_spec((D, F_out)),    # poseFinal weight (in, out)
                const_spec((1, F_out)),    # poseFinal bias
            ],
            out_specs=pl.BlockSpec((B, F_out, tt_eff), lambda i: (0, 0, i)),
        ),
        compiler_params=pltpu.CompilerParams(
            dimension_semantics=("parallel",),
            vmem_limit_bytes=vmem_limit,
        ),
        cost_estimate=cost,
    )(hidden_states, w1, b1, gamma, beta, w2, b2)
    return out


def init_params(key, latent_dim, out_feats, dtype=jnp.float32):
    """Deterministic synthetic parameters (shapes per nn.Module __init__)."""
    k1, k2, k3, k4, k5, k6 = jax.random.split(key, 6)
    s1 = 1.0 / math.sqrt(latent_dim)
    return {
        # stored already transposed to (in, out) for x @ W
        "w1": jax.random.uniform(k1, (latent_dim, latent_dim), dtype, -s1, s1),
        "b1": jax.random.uniform(k2, (1, latent_dim), dtype, -s1, s1),
        "gamma": 1.0 + 0.1 * jax.random.normal(k5, (1, latent_dim), dtype),
        "beta": 0.1 * jax.random.normal(k6, (1, latent_dim), dtype),
        "w2": jax.random.uniform(k3, (latent_dim, out_feats), dtype, -s1, s1),
        "b2": jax.random.uniform(k4, (1, out_feats), dtype, -s1, s1),
    }


if __name__ == "__main__":
    T, B = 8, 2            # sequence length, batch
    latent_dim = 32
    out_feats = 16

    key = jax.random.PRNGKey(0)
    kx, kp = jax.random.split(key)
    hidden_states = jax.random.normal(kx, (T, B, latent_dim), jnp.float32)
    params = init_params(kp, latent_dim, out_feats)

    # plain-JAX reference (exact erf GELU, two-pass LayerNorm)
    def ref(x, p):
        h = x @ p["w1"] + p["b1"][0]
        h = 0.5 * h * (1.0 + lax.erf(h / math.sqrt(2.0)))
        mu = jnp.mean(h, -1, keepdims=True)
        var = jnp.mean((h - mu) ** 2, -1, keepdims=True)
        h = (h - mu) / jnp.sqrt(var + 1e-12) * p["gamma"][0] + p["beta"][0]
        o = h @ p["w2"] + p["b2"][0]
        return jnp.transpose(o, (1, 2, 0))

    ref_out = ref(hidden_states, params)

    # 1) exact f32 matmul path — tight check.
    out = output_process_bert(hidden_states, params, matmul_dtype=jnp.float32)
    out = jax.block_until_ready(out)
    assert out.shape == (B, out_feats, T), out.shape
    assert jnp.allclose(out, ref_out, atol=1e-4, rtol=1e-4)

    # 2) default path (bf16 operands on v6e/v7x, f32 elsewhere) — loose check.
    out_auto = output_process_bert(hidden_states, params)
    out_auto = jax.block_until_ready(out_auto)
    assert out_auto.shape == (B, out_feats, T), out_auto.shape
    assert jnp.allclose(out_auto, ref_out, atol=5e-2, rtol=5e-2)

    # 3) tanh-approx GELU path (v5e VALU relief) — moderate check.
    out_tanh = output_process_bert(hidden_states, params,
                                   matmul_dtype=jnp.float32,
                                   approximate_gelu=True)
    out_tanh = jax.block_until_ready(out_tanh)
    assert out_tanh.shape == (B, out_feats, T), out_tanh.shape
    assert jnp.allclose(out_tanh, ref_out, atol=1e-2, rtol=1e-2)

    print("KERNEL_OK")
</pallas_src>

<mosaic_0001>
module attributes {stable_mosaic.version = 11 : i64} {
  func.func @_output_process_kernel(%arg0: i32, %arg1: memref<8x2x32xf32, #tpu.memory_space<vmem>>, %arg2: memref<32x32xf32, #tpu.memory_space<vmem>>, %arg3: memref<1x32xf32, #tpu.memory_space<vmem>>, %arg4: memref<1x32xf32, #tpu.memory_space<vmem>>, %arg5: memref<1x32xf32, #tpu.memory_space<vmem>>, %arg6: memref<32x16xf32, #tpu.memory_space<vmem>>, %arg7: memref<1x16xf32, #tpu.memory_space<vmem>>, %arg8: memref<2x16x8xf32, #tpu.memory_space<vmem>>) attributes {dimension_semantics = [#tpu.dimension_semantics<parallel>], iteration_bounds = array<i64: 1>, scalar_prefetch = 0 : i64, scratch_operands = 0 : i64, tpu.core_type = #tpu.core_type<tc>, window_params = [{pipeline_mode = #tpu.pipeline_mode<double_buffered>, transform_indices = @transform_0, window_bounds = array<i64: 8, 2, 32>}, {pipeline_mode = #tpu.pipeline_mode<synchronous>, transform_indices = @transform_1, window_bounds = array<i64: 32, 32>}, {pipeline_mode = #tpu.pipeline_mode<synchronous>, transform_indices = @transform_2, window_bounds = array<i64: 1, 32>}, {pipeline_mode = #tpu.pipeline_mode<synchronous>, transform_indices = @transform_3, window_bounds = array<i64: 1, 32>}, {pipeline_mode = #tpu.pipeline_mode<synchronous>, transform_indices = @transform_4, window_bounds = array<i64: 1, 32>}, {pipeline_mode = #tpu.pipeline_mode<synchronous>, transform_indices = @transform_5, window_bounds = array<i64: 32, 16>}, {pipeline_mode = #tpu.pipeline_mode<synchronous>, transform_indices = @transform_6, window_bounds = array<i64: 1, 16>}, {transform_indices = @transform_7, window_bounds = array<i64: 2, 16, 8>}]} {
    %c0 = arith.constant 0 : index
    %c0_0 = arith.constant 0 : index
    %0 = vector.load %arg2[%c0, %c0_0] : memref<32x32xf32, #tpu.memory_space<vmem>>, vector<32x32xf32>
    %c0_1 = arith.constant 0 : index
    %c0_2 = arith.constant 0 : index
    %1 = vector.load %arg6[%c0_1, %c0_2] : memref<32x16xf32, #tpu.memory_space<vmem>>, vector<32x16xf32>
    %c0_3 = arith.constant 0 : index
    %c0_4 = arith.constant 0 : index
    %2 = vector.load %arg3[%c0_3, %c0_4] : memref<1x32xf32, #tpu.memory_space<vmem>>, vector<1x32xf32>
    %c0_5 = arith.constant 0 : index
    %c0_6 = arith.constant 0 : index
    %3 = vector.load %arg7[%c0_5, %c0_6] : memref<1x16xf32, #tpu.memory_space<vmem>>, vector<1x16xf32>
    %c0_7 = arith.constant 0 : index
    %c0_8 = arith.constant 0 : index
    %4 = vector.load %arg4[%c0_7, %c0_8] : memref<1x32xf32, #tpu.memory_space<vmem>>, vector<1x32xf32>
    %c0_9 = arith.constant 0 : index
    %c0_10 = arith.constant 0 : index
    %5 = vector.load %arg5[%c0_9, %c0_10] : memref<1x32xf32, #tpu.memory_space<vmem>>, vector<1x32xf32>
    %c0_11 = arith.constant 0 : index
    %c0_12 = arith.constant 0 : index
    %c0_13 = arith.constant 0 : index
    %6 = vector.load %arg1[%c0_11, %c0_12, %c0_13] : memref<8x2x32xf32, #tpu.memory_space<vmem>>, vector<8x1x32xf32>
    %7 = vector.shape_cast %6 : vector<8x1x32xf32> to vector<8x32xf32>
    %cst = arith.constant dense<0.000000e+00> : vector<8x32xf32>
    %8 = tpu.matmul %7, %0, %cst {dimension_numbers = #tpu.dot_dimension_numbers<[1], [0], [0], [1], [0, 0, 1, 1], [], []>} : vector<8x32xf32>, vector<32x32xf32>, vector<8x32xf32> -> vector<8x32xf32>
    %9 = vector.broadcast %2 : vector<1x32xf32> to vector<8x32xf32>
    %10 = arith.addf %8, %9 : vector<8x32xf32>
    %cst_14 = arith.constant 5.000000e-01 : f32
    %11 = vector.broadcast %cst_14 : f32 to vector<8x32xf32>
    %12 = arith.mulf %11, %10 : vector<8x32xf32>
    %cst_15 = arith.constant 0.707106769 : f32
    %13 = vector.broadcast %cst_15 : f32 to vector<8x32xf32>
    %14 = arith.mulf %10, %13 : vector<8x32xf32>
    %15 = math.erf %14 : vector<8x32xf32>
    %cst_16 = arith.constant 1.000000e+00 : f32
    %16 = vector.broadcast %cst_16 : f32 to vector<8x32xf32>
    %17 = arith.addf %16, %15 : vector<8x32xf32>
    %18 = arith.mulf %12, %17 : vector<8x32xf32>
    %cst_17 = arith.constant dense<0.000000e+00> : vector<8xf32>
    %19 = vector.multi_reduction <add>, %18, %cst_17 [1] : vector<8x32xf32> to vector<8xf32>
    %20 = vector.shape_cast %19 : vector<8xf32> to vector<8x1xf32>
    %21 = arith.mulf %18, %18 : vector<8x32xf32>
    %cst_18 = arith.constant dense<0.000000e+00> : vector<8xf32>
    %22 = vector.multi_reduction <add>, %21, %cst_18 [1] : vector<8x32xf32> to vector<8xf32>
    %23 = vector.shape_cast %22 : vector<8xf32> to vector<8x1xf32>
    %cst_19 = arith.constant 3.125000e-02 : f32
    %24 = vector.broadcast %cst_19 : f32 to vector<8x1xf32>
    %25 = arith.mulf %20, %24 : vector<8x1xf32>
    %cst_20 = arith.constant 3.125000e-02 : f32
    %26 = vector.broadcast %cst_20 : f32 to vector<8x1xf32>
    %27 = arith.mulf %23, %26 : vector<8x1xf32>
    %28 = arith.mulf %25, %25 : vector<8x1xf32>
    %29 = arith.subf %27, %28 : vector<8x1xf32>
    %cst_21 = arith.constant 0.000000e+00 : f32
    %30 = vector.broadcast %cst_21 : f32 to vector<8x1xf32>
    %31 = arith.maximumf %29, %30 : vector<8x1xf32>
    %32 = vector.broadcast %25 : vector<8x1xf32> to vector<8x32xf32>
    %33 = arith.subf %18, %32 : vector<8x32xf32>
    %cst_22 = arith.constant 9.99999996E-13 : f32
    %34 = vector.broadcast %cst_22 : f32 to vector<8x1xf32>
    %35 = arith.addf %31, %34 : vector<8x1xf32>
    %36 = math.rsqrt %35 : vector<8x1xf32>
    %37 = vector.broadcast %36 : vector<8x1xf32> to vector<8x32xf32>
    %38 = arith.mulf %33, %37 : vector<8x32xf32>
    %39 = vector.broadcast %4 : vector<1x32xf32> to vector<8x32xf32>
    %40 = arith.mulf %38, %39 : vector<8x32xf32>
    %41 = vector.broadcast %5 : vector<1x32xf32> to vector<8x32xf32>
    %42 = arith.addf %40, %41 : vector<8x32xf32>
    %cst_23 = arith.constant dense<0.000000e+00> : vector<8x16xf32>
    %43 = tpu.matmul %42, %1, %cst_23 {dimension_numbers = #tpu.dot_dimension_numbers<[1], [0], [0], [1], [0, 0, 1, 1], [], []>} : vector<8x32xf32>, vector<32x16xf32>, vector<8x16xf32> -> vector<8x16xf32>
    %44 = vector.broadcast %3 : vector<1x16xf32> to vector<8x16xf32>
    %45 = arith.addf %43, %44 : vector<8x16xf32>
    %46 = tpu.transpose %45, [1, 0] : vector<8x16xf32> -> vector<16x8xf32>
    %c0_24 = arith.constant 0 : index
    %c0_25 = arith.constant 0 : index
    %c0_26 = arith.constant 0 : index
    %47 = vector.load %arg8[%c0_24, %c0_25, %c0_26] : memref<2x16x8xf32, #tpu.memory_space<vmem>>, vector<1x16x8xf32>
    %48 = vector.shape_cast %47 : vector<1x16x8xf32> to vector<16x8xf32>
    %49 = vector.shape_cast %46 : vector<16x8xf32> to vector<1x16x8xf32>
    tpu.vector_store %arg8[%c0_24, %c0_25, %c0_26], %49 {strides = array<i32>} : memref<2x16x8xf32, #tpu.memory_space<vmem>>, vector<1x16x8xf32>,
    %c0_27 = arith.constant 0 : index
    %c1 = arith.constant 1 : index
    %c0_28 = arith.constant 0 : index
    %50 = vector.load %arg1[%c0_27, %c1, %c0_28] : memref<8x2x32xf32, #tpu.memory_space<vmem>>, vector<8x1x32xf32>
    %51 = vector.shape_cast %50 : vector<8x1x32xf32> to vector<8x32xf32>
    %cst_29 = arith.constant dense<0.000000e+00> : vector<8x32xf32>
    %52 = tpu.matmul %51, %0, %cst_29 {dimension_numbers = #tpu.dot_dimension_numbers<[1], [0], [0], [1], [0, 0, 1, 1], [], []>} : vector<8x32xf32>, vector<32x32xf32>, vector<8x32xf32> -> vector<8x32xf32>
    %53 = vector.broadcast %2 : vector<1x32xf32> to vector<8x32xf32>
    %54 = arith.addf %52, %53 : vector<8x32xf32>
    %cst_30 = arith.constant 5.000000e-01 : f32
    %55 = vector.broadcast %cst_30 : f32 to vector<8x32xf32>
    %56 = arith.mulf %55, %54 : vector<8x32xf32>
    %cst_31 = arith.constant 0.707106769 : f32
    %57 = vector.broadcast %cst_31 : f32 to vector<8x32xf32>
    %58 = arith.mulf %54, %57 : vector<8x32xf32>
    %59 = math.erf %58 : vector<8x32xf32>
    %cst_32 = arith.constant 1.000000e+00 : f32
    %60 = vector.broadcast %cst_32 : f32 to vector<8x32xf32>
    %61 = arith.addf %60, %59 : vector<8x32xf32>
    %62 = arith.mulf %56, %61 : vector<8x32xf32>
    %cst_33 = arith.constant dense<0.000000e+00> : vector<8xf32>
    %63 = vector.multi_reduction <add>, %62, %cst_33 [1] : vector<8x32xf32> to vector<8xf32>
    %64 = vector.shape_cast %63 : vector<8xf32> to vector<8x1xf32>
    %65 = arith.mulf %62, %62 : vector<8x32xf32>
    %cst_34 = arith.constant dense<0.000000e+00> : vector<8xf32>
    %66 = vector.multi_reduction <add>, %65, %cst_34 [1] : vector<8x32xf32> to vector<8xf32>
    %67 = vector.shape_cast %66 : vector<8xf32> to vector<8x1xf32>
    %cst_35 = arith.constant 3.125000e-02 : f32
    %68 = vector.broadcast %cst_35 : f32 to vector<8x1xf32>
    %69 = arith.mulf %64, %68 : vector<8x1xf32>
    %cst_36 = arith.constant 3.125000e-02 : f32
    %70 = vector.broadcast %cst_36 : f32 to vector<8x1xf32>
    %71 = arith.mulf %67, %70 : vector<8x1xf32>
    %72 = arith.mulf %69, %69 : vector<8x1xf32>
    %73 = arith.subf %71, %72 : vector<8x1xf32>
    %cst_37 = arith.constant 0.000000e+00 : f32
    %74 = vector.broadcast %cst_37 : f32 to vector<8x1xf32>
    %75 = arith.maximumf %73, %74 : vector<8x1xf32>
    %76 = vector.broadcast %69 : vector<8x1xf32> to vector<8x32xf32>
    %77 = arith.subf %62, %76 : vector<8x32xf32>
    %cst_38 = arith.constant 9.99999996E-13 : f32
    %78 = vector.broadcast %cst_38 : f32 to vector<8x1xf32>
    %79 = arith.addf %75, %78 : vector<8x1xf32>
    %80 = math.rsqrt %79 : vector<8x1xf32>
    %81 = vector.broadcast %80 : vector<8x1xf32> to vector<8x32xf32>
    %82 = arith.mulf %77, %81 : vector<8x32xf32>
    %83 = vector.broadcast %4 : vector<1x32xf32> to vector<8x32xf32>
    %84 = arith.mulf %82, %83 : vector<8x32xf32>
    %85 = vector.broadcast %5 : vector<1x32xf32> to vector<8x32xf32>
    %86 = arith.addf %84, %85 : vector<8x32xf32>
    %cst_39 = arith.constant dense<0.000000e+00> : vector<8x16xf32>
    %87 = tpu.matmul %86, %1, %cst_39 {dimension_numbers = #tpu.dot_dimension_numbers<[1], [0], [0], [1], [0, 0, 1, 1], [], []>} : vector<8x32xf32>, vector<32x16xf32>, vector<8x16xf32> -> vector<8x16xf32>
    %88 = vector.broadcast %3 : vector<1x16xf32> to vector<8x16xf32>
    %89 = arith.addf %87, %88 : vector<8x16xf32>
    %90 = tpu.transpose %89, [1, 0] : vector<8x16xf32> -> vector<16x8xf32>
    %c1_40 = arith.constant 1 : index
    %c0_41 = arith.constant 0 : index
    %c0_42 = arith.constant 0 : index
    %91 = vector.load %arg8[%c1_40, %c0_41, %c0_42] : memref<2x16x8xf32, #tpu.memory_space<vmem>>, vector<1x16x8xf32>
    %92 = vector.shape_cast %91 : vector<1x16x8xf32> to vector<16x8xf32>
    %93 = vector.shape_cast %90 : vector<16x8xf32> to vector<1x16x8xf32>
    tpu.vector_store %arg8[%c1_40, %c0_41, %c0_42], %93 {strides = array<i32>} : memref<2x16x8xf32, #tpu.memory_space<vmem>>, vector<1x16x8xf32>,
    return
  }
  func.func @transform_0(%arg0: i32) -> (i32, i32, i32) {
    %c0_i32 = arith.constant 0 : i32
    %c0_i32_0 = arith.constant 0 : i32
    %c0_i32_1 = arith.constant 0 : i32
    return %arg0, %c0_i32, %c0_i32_0 : i32, i32, i32
  }
  func.func @transform_1(%arg0: i32) -> (i32, i32) {
    %c0_i32 = arith.constant 0 : i32
    %c0_i32_0 = arith.constant 0 : i32
    %c0_i32_1 = arith.constant 0 : i32
    return %c0_i32, %c0_i32_0 : i32, i32
  }
  func.func @transform_2(%arg0: i32) -> (i32, i32) {
    %c0_i32 = arith.constant 0 : i32
    %c0_i32_0 = arith.constant 0 : i32
    %c0_i32_1 = arith.constant 0 : i32
    return %c0_i32, %c0_i32_0 : i32, i32
  }
  func.func @transform_3(%arg0: i32) -> (i32, i32) {
    %c0_i32 = arith.constant 0 : i32
    %c0_i32_0 = arith.constant 0 : i32
    %c0_i32_1 = arith.constant 0 : i32
    return %c0_i32, %c0_i32_0 : i32, i32
  }
  func.func @transform_4(%arg0: i32) -> (i32, i32) {
    %c0_i32 = arith.constant 0 : i32
    %c0_i32_0 = arith.constant 0 : i32
    %c0_i32_1 = arith.constant 0 : i32
    return %c0_i32, %c0_i32_0 : i32, i32
  }
  func.func @transform_5(%arg0: i32) -> (i32, i32) {
    %c0_i32 = arith.constant 0 : i32
    %c0_i32_0 = arith.constant 0 : i32
    %c0_i32_1 = arith.constant 0 : i32
    return %c0_i32, %c0_i32_0 : i32, i32
  }
  func.func @transform_6(%arg0: i32) -> (i32, i32) {
    %c0_i32 = arith.constant 0 : i32
    %c0_i32_0 = arith.constant 0 : i32
    %c0_i32_1 = arith.constant 0 : i32
    return %c0_i32, %c0_i32_0 : i32, i32
  }
  func.func @transform_7(%arg0: i32) -> (i32, i32, i32) {
    %c0_i32 = arith.constant 0 : i32
    %c0_i32_0 = arith.constant 0 : i32
    %c0_i32_1 = arith.constant 0 : i32
    return %c0_i32, %c0_i32_0, %arg0 : i32, i32, i32
  }
}

</mosaic_0001>

<llo_original>
// kernel: tpu_custom_call.1
$region0: #{tpu_custom_call.1}
  #allocation0 [shape = 'u32[]', space=smem, size = 0x4, offset = 0x4, fixed_abs, tag = 'smem constant byte address 0x4 - core index']
  #allocation1 [shape = 'u32[144,128]{1,0:T(1,128)}', space=vmem, size = 0x12000, scoped, tag = 'internal scratch']
  %s0 = inlined_call_operand.vmem [shape: f32[8,2,32], index: 0, kind: input, shape index: {}]
  %s1 = inlined_call_operand.vmem [shape: f32[32,32], index: 1, kind: input, shape index: {}]
  %s2 = inlined_call_operand.vmem [shape: f32[1,32], index: 2, kind: input, shape index: {}]
  %s3 = inlined_call_operand.vmem [shape: f32[1,32], index: 3, kind: input, shape index: {}]
  %s4 = inlined_call_operand.hbm [shape: f32[1,32], index: 4, kind: input, shape index: {}]
  %s5 = inlined_call_operand.vmem [shape: f32[32,16], index: 5, kind: input, shape index: {}]
  %s6 = inlined_call_operand.vmem [shape: f32[1,16], index: 6, kind: input, shape index: {}]
  %s7 = inlined_call_operand.vmem [shape: f32[2,16,8], index: 7, kind: output, shape index: {}]
  %s8 = sld [smem:[#allocation0]]
  $region42: #{tpu_custom_call.1} parent=0
    _
  %s10 = ssub.s32 1, %s8
  %s11 = scalar_select 0, %s10, %s8
  $region1: #{tpu_custom_call.1} parent=0
    #allocation2 [shape = 'u8[512]{0}', space=vmem, size = 0x400, scoped, tag = 'input window, operand 4, single buffered']
    #allocation3 [shape = 's32[1]{0}', space=sflag, size = 0x4, scoped, tag = 'scoped memory for tpu_custom_call.1']
    %12 = vsyncpa [#allocation3], 0
    // Predicated region
    $region2: #{tpu_custom_call.1} parent=1 // pred_check
      _
    $region3: #{tpu_custom_call.1} parent=1 // pred_check_branch
      %14 = sbr.rel (0) target = $region5
    $region4: #{tpu_custom_call.1} parent=1 // pred_region
      _
    $region5: #{tpu_custom_call.1} parent=1 // pred_fallthru
      _
    // Predicated region
    $region6: #{tpu_custom_call.1} parent=1 // pred_check
      _
    $region7: #{tpu_custom_call.1} parent=1 // pred_check_branch
      %16 = sbr.rel (0) target = $region9
    $region8: #{tpu_custom_call.1} parent=1 // pred_region
      _
    $region9: #{tpu_custom_call.1} parent=1 // pred_fallthru
      _
    // Predicated region
    $region10: #{tpu_custom_call.1} parent=1 // pred_check
      _
    $region11: #{tpu_custom_call.1} parent=1 // pred_check_branch
      %18 = sbr.rel (0) target = $region13
    $region12: #{tpu_custom_call.1} parent=1 // pred_region
      _
    $region13: #{tpu_custom_call.1} parent=1 // pred_fallthru
      _
    // Predicated region
    $region14: #{tpu_custom_call.1} parent=1 // pred_check
      _
    $region15: #{tpu_custom_call.1} parent=1 // pred_check_branch
      %20 = sbr.rel (0) target = $region17
    $region16: #{tpu_custom_call.1} parent=1 // pred_region
      _
    $region17: #{tpu_custom_call.1} parent=1 // pred_fallthru
      _
    // Predicated region
    $region18: #{tpu_custom_call.1} parent=1 // pred_check
      _
    $region19: #{tpu_custom_call.1} parent=1 // pred_check_branch
      %22 = sbr.rel (0) target = $region21
    $region20: #{tpu_custom_call.1} parent=1 // pred_region
      %s24 = ssub.s32 16, 16
      %25 = vsyncadd [#allocation3], %s24
      %s27 = sshll.u32 [#allocation2], 4
      %s28 = int_to_ptr.vmem [resolvable:$true] %s27
      %30 = dma.hbm_to_vmem [thread:$0]  %s4, 16, %s28, [#allocation3]
    $region21: #{tpu_custom_call.1} parent=1 // pred_fallthru
      _
    // Predicated region
    $region22: #{tpu_custom_call.1} parent=1 // pred_check
      _
    $region23: #{tpu_custom_call.1} parent=1 // pred_check_branch
      %32 = sbr.rel (0) target = $region25
    $region24: #{tpu_custom_call.1} parent=1 // pred_region
      _
    $region25: #{tpu_custom_call.1} parent=1 // pred_fallthru
      _
    // Predicated region
    $region26: #{tpu_custom_call.1} parent=1 // pred_check
      _
    $region27: #{tpu_custom_call.1} parent=1 // pred_check_branch
      %34 = sbr.rel (0) target = $region29
    $region28: #{tpu_custom_call.1} parent=1 // pred_region
      _
    $region29: #{tpu_custom_call.1} parent=1 // pred_fallthru
      _
    // Predicated region
    $region30: #{tpu_custom_call.1} parent=1 // pred_check
      _
    $region31: #{tpu_custom_call.1} parent=1 // pred_check_branch
      %36 = sbr.rel (0) target = $region33
    $region32: #{tpu_custom_call.1} parent=1 // pred_region
      %37 = dma.done [#allocation3], 16
    $region33: #{tpu_custom_call.1} parent=1 // pred_fallthru
      _
    %v38 = vld [vmem:[%s1] sm:$0xff]
    %v39 = vld [vmem:[%s1 + $0x8] sm:$0xff]
    %v40 = vld [vmem:[%s1 + $0x10] sm:$0xff]
    %v41 = vld [vmem:[%s1 + $0x18] sm:$0xff]
    %v42 = vld [vmem:[%s5] sm:$0xff]
    %v43 = vld [vmem:[%s5 + $0x8] sm:$0xff]
    %v44 = vld [vmem:[%s5 + $0x10] sm:$0xff]
    %v45 = vld [vmem:[%s5 + $0x18] sm:$0xff]
    %v46 = vld [vmem:[%s2] sm:$0x1]
    %v47 = vld [vmem:[%s6] sm:$0x1]
    %v48 = vld [vmem:[%s3] sm:$0x1]
    %v49 = vld [vmem:[#allocation2] sm:$0x1]
    %v50 = vld [vmem:[%s0] sm:$0x1]
    %v51 = vld [vmem:[%s0 + $0x2] sm:$0x1]
    %v52 = vld [vmem:[%s0 + $0x4] sm:$0x1]
    %v53 = vld [vmem:[%s0 + $0x6] sm:$0x1]
    %v54 = vld [vmem:[%s0 + $0x8] sm:$0x1]
    %v55 = vld [vmem:[%s0 + $0xa] sm:$0x1]
    %v56 = vld [vmem:[%s0 + $0xc] sm:$0x1]
    %v57 = vld [vmem:[%s0 + $0xe] sm:$0x1]
    %v59 = vlaneseq
    %v60 = vshrl.u32 %v59, 7
    %v61 = vsub.s32 0, %v60
    %v62 = vrot.slane %v46, %v61
    %v72 = vrot.slane %v51, 7
    %vm73 = vcmask 1041409
    %v74 = vsel %vm73, %v72, %v50
    %v75 = vrot.slane %v52, 6
    %vm76 = vcmask 1042434
    %v77 = vsel %vm76, %v75, %v74
    %v78 = vrot.slane %v53, 5
    %vm79 = vcmask 1043459
    %v80 = vsel %vm79, %v78, %v77
    %v81 = vrot.slane %v54, 4
    %vm82 = vcmask 1044484
    %v83 = vsel %vm82, %v81, %v80
    %v84 = vrot.slane %v55, 3
    %vm85 = vcmask 1045509
    %v86 = vsel %vm85, %v84, %v83
    %v87 = vrot.slane %v56, 2
    %vm88 = vcmask 1046534
    %v89 = vsel %vm88, %v87, %v86
    %v90 = vrot.slane %v57, 1
    %vm91 = vcmask 1047559
    %v92 = vsel %vm91, %v90, %v89
    %vm93 = vcmask 261120
    %v94 = vsel %vm93, %v92, 0
    %96 = vmatprep.subr.mxu0 0.0
    %97 = vmatpush1.msra.mxu0 %v38
    %98 = vmatprep.subr.mxu0 0.0
    %99 = vmatpush1.msra.mxu0 %v39
    %100 = vmatprep.subr.mxu0 0.0
    %101 = vmatpush1.msra.mxu0 %v40
    %102 = vmatprep.subr.mxu0 0.0
    %103 = vmatpush1.msra.mxu0 %v41
    %104 = vmatprep.subr.mxu0 0.0
    %105 = vmatpush1.msra.mxu0 0.0
    %106 = vmatprep.subr.mxu0 0.0
    %107 = vmatpush1.msra.mxu0 0.0
    %108 = vmatprep.subr.mxu0 0.0
    %109 = vmatpush1.msra.mxu0 0.0
    %110 = vmatprep.subr.mxu0 0.0
    %111 = vmatpush1.msra.mxu0 0.0
    %112 = vmatprep.subr.mxu0 0.0
    %113 = vmatpush1.msra.mxu0 0.0
    %114 = vmatprep.subr.mxu0 0.0
    %115 = vmatpush1.msra.mxu0 0.0
    %116 = vmatprep.subr.mxu0 0.0
    %117 = vmatpush1.msra.mxu0 0.0
    %118 = vmatprep.subr.mxu0 0.0
    %119 = vmatpush1.msra.mxu0 0.0
    %120 = vmatprep.subr.mxu0 0.0
    %121 = vmatpush1.msra.mxu0 0.0
    %122 = vmatprep.subr.mxu0 0.0
    %123 = vmatpush1.msra.mxu0 0.0
    %124 = vmatprep.subr.mxu0 0.0
    %125 = vmatpush1.msra.mxu0 0.0
    %126 = vmatprep.subr.mxu0 0.0
    %127 = vmatpush1.msra.mxu0 0.0
    %128 = vmatprep.subr.mxu0 0.0
    %129 = vmatpush1.msra.mxu0 0.0
    %130 = vmatprep.subr.mxu0 0.0
    %131 = vmatpush1.msra.mxu0 0.0
    %132 = vmatprep.subr.mxu0 0.0
    %133 = vmatpush1.msra.mxu0 0.0
    %134 = vmatprep.subr.mxu0 0.0
    %135 = vmatpush1.msra.mxu0 0.0
    %136 = vmatprep.subr.mxu0 0.0
    %137 = vmatpush1.msra.mxu0 0.0
    %138 = vmatprep.subr.mxu0 0.0
    %139 = vmatpush1.msra.mxu0 0.0
    %140 = vmatprep.subr.mxu0 0.0
    %141 = vmatpush1.msra.mxu0 0.0
    %142 = vmatprep.subr.mxu0 0.0
    %143 = vmatpush1.msra.mxu0 0.0
    %144 = vmatprep.subr.mxu0 0.0
    %145 = vmatpush1.msra.mxu0 0.0
    %146 = vmatprep.subr.mxu0 0.0
    %147 = vmatpush1.msra.mxu0 0.0
    %148 = vmatprep.subr.mxu0 0.0
    %149 = vmatpush1.msra.mxu0 0.0
    %150 = vmatprep.subr.mxu0 0.0
    %151 = vmatpush1.msra.mxu0 0.0
    %152 = vmatprep.subr.mxu0 0.0
    %153 = vmatpush1.msra.mxu0 0.0
    %154 = vmatprep.subr.mxu0 0.0
    %155 = vmatpush1.msra.mxu0 0.0
    %156 = vmatprep.subr.mxu0 0.0
    %157 = vmatpush1.msra.mxu0 0.0
    %158 = vmatprep.subr.mxu0 0.0
    %159 = vmatpush1.msra.mxu0 0.0
    %160 = vmatprep.mubr.f32.mxu0 0.0
    %161 = vmatmul.mubr.f32.gmra.mrb[0].mxu0 %v94
    %v162 = vpop.f32.mrb[0].mxu0
    %v163 = vadd.f32 %v62, %v162
    %v164 = vpop.f32.mrb[0].mxu0
    %165 = vdwg.mxu0
    %v166 = vmul.f32 %v163, 0.5
    %v167 = vmul.f32 %v163, 0.70710677
    %v168 = verf.f32.pop %v167
    %v169 = vadd.f32 %v168, 1.0
    %v170 = vmul.f32 %v166, %v169
    %v171 = vsel %vm93, %v170, 0.0
    %172 = vadd.xlane.f32.xlu0 %v171
    %v173 = vpop.xlane.xlu0 %172
    %v174 = vmul.f32 %v170, %v170
    %v175 = vsel %vm93, %v174, 0.0
    %176 = vadd.xlane.f32.xlu0 %v175
    %v177 = vpop.xlane.xlu0 %176
    %v178 = vmul.f32 %v173, 0.03125
    %v179 = vmul.f32 %v177, 0.03125
    %v180 = vmul.f32 %v178, %v178
    %v181 = vsub.f32 %v179, %v180
    %v182 = vmax.f32 %v181, 0.0
    %v183 = vsub.f32 %v170, %v178
    %v184 = vadd.f32 %v182, 1e-12
    %v185 = vrsqrt.pop %v184
    %v186 = vmul.f32 %v183, %v185
    %v188 = vlaneseq
    %v189 = vshrl.u32 %v188, 7
    %v190 = vsub.s32 0, %v189
    %v191 = vrot.slane %v48, %v190
    %v193 = vmul.f32 %v186, %v191
    %v195 = vlaneseq
    %v196 = vshrl.u32 %v195, 7
    %v197 = vsub.s32 0, %v196
    %v198 = vrot.slane %v49, %v197
    %v200 = vadd.f32 %v193, %v198
    %v202 = vlaneseq
    %v203 = vshrl.u32 %v202, 7
    %v204 = vsub.s32 0, %v203
    %v205 = vrot.slane %v47, %v204
    %v208 = vsel %vm93, %v200, 0
    %210 = vmatprep.subr.mxu0 0.0
    %211 = vmatpush1.msra.mxu0 %v42
    %212 = vmatprep.subr.mxu0 0.0
    %213 = vmatpush1.msra.mxu0 %v43
    %214 = vmatprep.subr.mxu0 0.0
    %215 = vmatpush1.msra.mxu0 %v44
    %216 = vmatprep.subr.mxu0 0.0
    %217 = vmatpush1.msra.mxu0 %v45
    %218 = vmatprep.subr.mxu0 0.0
    %219 = vmatpush1.msra.mxu0 0.0
    %220 = vmatprep.subr.mxu0 0.0
    %221 = vmatpush1.msra.mxu0 0.0
    %222 = vmatprep.subr.mxu0 0.0
    %223 = vmatpush1.msra.mxu0 0.0
    %224 = vmatprep.subr.mxu0 0.0
    %225 = vmatpush1.msra.mxu0 0.0
    %226 = vmatprep.subr.mxu0 0.0
    %227 = vmatpush1.msra.mxu0 0.0
    %228 = vmatprep.subr.mxu0 0.0
    %229 = vmatpush1.msra.mxu0 0.0
    %230 = vmatprep.subr.mxu0 0.0
    %231 = vmatpush1.msra.mxu0 0.0
    %232 = vmatprep.subr.mxu0 0.0
    %233 = vmatpush1.msra.mxu0 0.0
    %234 = vmatprep.subr.mxu0 0.0
    %235 = vmatpush1.msra.mxu0 0.0
    %236 = vmatprep.subr.mxu0 0.0
    %237 = vmatpush1.msra.mxu0 0.0
    %238 = vmatprep.subr.mxu0 0.0
    %239 = vmatpush1.msra.mxu0 0.0
    %240 = vmatprep.subr.mxu0 0.0
    %241 = vmatpush1.msra.mxu0 0.0
    %242 = vmatprep.subr.mxu0 0.0
    %243 = vmatpush1.msra.mxu0 0.0
    %244 = vmatprep.subr.mxu0 0.0
    %245 = vmatpush1.msra.mxu0 0.0
    %246 = vmatprep.subr.mxu0 0.0
    %247 = vmatpush1.msra.mxu0 0.0
    %248 = vmatprep.subr.mxu0 0.0
    %249 = vmatpush1.msra.mxu0 0.0
    %250 = vmatprep.subr.mxu0 0.0
    %251 = vmatpush1.msra.mxu0 0.0
    %252 = vmatprep.subr.mxu0 0.0
    %253 = vmatpush1.msra.mxu0 0.0
    %254 = vmatprep.subr.mxu0 0.0
    %255 = vmatpush1.msra.mxu0 0.0
    %256 = vmatprep.subr.mxu0 0.0
    %257 = vmatpush1.msra.mxu0 0.0
    %258 = vmatprep.subr.mxu0 0.0
    %259 = vmatpush1.msra.mxu0 0.0
    %260 = vmatprep.subr.mxu0 0.0
    %261 = vmatpush1.msra.mxu0 0.0
    %262 = vmatprep.subr.mxu0 0.0
    %263 = vmatpush1.msra.mxu0 0.0
    %264 = vmatprep.subr.mxu0 0.0
    %265 = vmatpush1.msra.mxu0 0.0
    %266 = vmatprep.subr.mxu0 0.0
    %267 = vmatpush1.msra.mxu0 0.0
    %268 = vmatprep.subr.mxu0 0.0
    %269 = vmatpush1.msra.mxu0 0.0
    %270 = vmatprep.subr.mxu0 0.0
    %271 = vmatpush1.msra.mxu0 0.0
    %272 = vmatprep.subr.mxu0 0.0
    %273 = vmatpush1.msra.mxu0 0.0
    %274 = vmatprep.mubr.f32.mxu0 0.0
    %275 = vmatmul.mubr.f32.gmra.mrb[0].mxu0 %v208
    %v276 = vpop.f32.mrb[0].mxu0
    %v277 = vadd.f32 %v205, %v276
    %v278 = vpop.f32.mrb[0].mxu0
    %279 = vdwg.mxu0
    %280 = vxpose.xlu0.b32.start [1/16] %v277, 128
    %281 = vxpose.xlu0.b32.cont [2/16] 0.0, 128
    %282 = vxpose.xlu0.b32.cont [3/16] 0.0, 128
    %283 = vxpose.xlu0.b32.cont [4/16] 0.0, 128
    %284 = vxpose.xlu0.b32.cont [5/16] 0.0, 128
    %285 = vxpose.xlu0.b32.cont [6/16] 0.0, 128
    %286 = vxpose.xlu0.b32.cont [7/16] 0.0, 128
    %287 = vxpose.xlu0.b32.cont [8/16] 0.0, 128
    %288 = vxpose.xlu0.b32.cont [9/16] 0.0, 128
    %289 = vxpose.xlu0.b32.cont [10/16] 0.0, 128
    %290 = vxpose.xlu0.b32.cont [11/16] 0.0, 128
    %291 = vxpose.xlu0.b32.cont [12/16] 0.0, 128
    %292 = vxpose.xlu0.b32.cont [13/16] 0.0, 128
    %293 = vxpose.xlu0.b32.cont [14/16] 0.0, 128
    %294 = vxpose.xlu0.b32.cont [15/16] 0.0, 128
    %295 = vxpose.xlu0.b32.end [16/16] 0.0, 128
    %v296 = vpop.trf.xlu0
    %v297 = vpop.trf.xlu0
    %v298 = vpop.trf.xlu0
    %v299 = vpop.trf.xlu0
    %v300 = vpop.trf.xlu0
    %v301 = vpop.trf.xlu0
    %v302 = vpop.trf.xlu0
    %v303 = vpop.trf.xlu0
    %v304 = vpop.trf.xlu0
    %v305 = vpop.trf.xlu0
    %v306 = vpop.trf.xlu0
    %v307 = vpop.trf.xlu0
    %v308 = vpop.trf.xlu0
    %v309 = vpop.trf.xlu0
    %v310 = vpop.trf.xlu0
    %v311 = vpop.trf.xlu0
    %vm312 = vcmask 64512
    %313 = vst.msk [vmem:[%s7] sm:$0xff] %vm312, %v296
    %314 = vst.msk [vmem:[%s7 + $0x8] sm:$0xff] %vm312, %v297
    %v315 = vld [vmem:[%s0 + $0x1] sm:$0x1]
    %v316 = vld [vmem:[%s0 + $0x3] sm:$0x1]
    %v317 = vld [vmem:[%s0 + $0x5] sm:$0x1]
    %v318 = vld [vmem:[%s0 + $0x7] sm:$0x1]
    %v319 = vld [vmem:[%s0 + $0x9] sm:$0x1]
    %v320 = vld [vmem:[%s0 + $0xb] sm:$0x1]
    %v321 = vld [vmem:[%s0 + $0xd] sm:$0x1]
    %v322 = vld [vmem:[%s0 + $0xf] sm:$0x1]
    %v331 = vrot.slane %v316, 7
    %v332 = vsel %vm73, %v331, %v315
    %v333 = vrot.slane %v317, 6
    %v334 = vsel %vm76, %v333, %v332
    %v335 = vrot.slane %v318, 5
    %v336 = vsel %vm79, %v335, %v334
    %v337 = vrot.slane %v319, 4
    %v338 = vsel %vm82, %v337, %v336
    %v339 = vrot.slane %v320, 3
    %v340 = vsel %vm85, %v339, %v338
    %v341 = vrot.slane %v321, 2
    %v342 = vsel %vm88, %v341, %v340
    %v343 = vrot.slane %v322, 1
    %v344 = vsel %vm91, %v343, %v342
    %v345 = vsel %vm93, %v344, 0
    %347 = vmatprep.subr.mxu0 0.0
    %348 = vmatpush1.msra.mxu0 %v38
    %349 = vmatprep.subr.mxu0 0.0
    %350 = vmatpush1.msra.mxu0 %v39
    %351 = vmatprep.subr.mxu0 0.0
    %352 = vmatpush1.msra.mxu0 %v40
    %353 = vmatprep.subr.mxu0 0.0
    %354 = vmatpush1.msra.mxu0 %v41
    %355 = vmatprep.subr.mxu0 0.0
    %356 = vmatpush1.msra.mxu0 0.0
    %357 = vmatprep.subr.mxu0 0.0
    %358 = vmatpush1.msra.mxu0 0.0
    %359 = vmatprep.subr.mxu0 0.0
    %360 = vmatpush1.msra.mxu0 0.0
    %361 = vmatprep.subr.mxu0 0.0
    %362 = vmatpush1.msra.mxu0 0.0
    %363 = vmatprep.subr.mxu0 0.0
    %364 = vmatpush1.msra.mxu0 0.0
    %365 = vmatprep.subr.mxu0 0.0
    %366 = vmatpush1.msra.mxu0 0.0
    %367 = vmatprep.subr.mxu0 0.0
    %368 = vmatpush1.msra.mxu0 0.0
    %369 = vmatprep.subr.mxu0 0.0
    %370 = vmatpush1.msra.mxu0 0.0
    %371 = vmatprep.subr.mxu0 0.0
    %372 = vmatpush1.msra.mxu0 0.0
    %373 = vmatprep.subr.mxu0 0.0
    %374 = vmatpush1.msra.mxu0 0.0
    %375 = vmatprep.subr.mxu0 0.0
    %376 = vmatpush1.msra.mxu0 0.0
    %377 = vmatprep.subr.mxu0 0.0
    %378 = vmatpush1.msra.mxu0 0.0
    %379 = vmatprep.subr.mxu0 0.0
    %380 = vmatpush1.msra.mxu0 0.0
    %381 = vmatprep.subr.mxu0 0.0
    %382 = vmatpush1.msra.mxu0 0.0
    %383 = vmatprep.subr.mxu0 0.0
    %384 = vmatpush1.msra.mxu0 0.0
    %385 = vmatprep.subr.mxu0 0.0
    %386 = vmatpush1.msra.mxu0 0.0
    %387 = vmatprep.subr.mxu0 0.0
    %388 = vmatpush1.msra.mxu0 0.0
    %389 = vmatprep.subr.mxu0 0.0
    %390 = vmatpush1.msra.mxu0 0.0
    %391 = vmatprep.subr.mxu0 0.0
    %392 = vmatpush1.msra.mxu0 0.0
    %393 = vmatprep.subr.mxu0 0.0
    %394 = vmatpush1.msra.mxu0 0.0
    %395 = vmatprep.subr.mxu0 0.0
    %396 = vmatpush1.msra.mxu0 0.0
    %397 = vmatprep.subr.mxu0 0.0
    %398 = vmatpush1.msra.mxu0 0.0
    %399 = vmatprep.subr.mxu0 0.0
    %400 = vmatpush1.msra.mxu0 0.0
    %401 = vmatprep.subr.mxu0 0.0
    %402 = vmatpush1.msra.mxu0 0.0
    %403 = vmatprep.subr.mxu0 0.0
    %404 = vmatpush1.msra.mxu0 0.0
    %405 = vmatprep.subr.mxu0 0.0
    %406 = vmatpush1.msra.mxu0 0.0
    %407 = vmatprep.subr.mxu0 0.0
    %408 = vmatpush1.msra.mxu0 0.0
    %409 = vmatprep.subr.mxu0 0.0
    %410 = vmatpush1.msra.mxu0 0.0
    %411 = vmatprep.mubr.f32.mxu0 0.0
    %412 = vmatmul.mubr.f32.gmra.mrb[0].mxu0 %v345
    %v413 = vpop.f32.mrb[0].mxu0
    %v414 = vadd.f32 %v62, %v413
    %v415 = vpop.f32.mrb[0].mxu0
    %416 = vdwg.mxu0
    %v417 = vmul.f32 %v414, 0.5
    %v418 = vmul.f32 %v414, 0.70710677
    %v419 = verf.f32.pop %v418
    %v420 = vadd.f32 %v419, 1.0
    %v421 = vmul.f32 %v417, %v420
    %v422 = vsel %vm93, %v421, 0.0
    %423 = vadd.xlane.f32.xlu0 %v422
    %v424 = vpop.xlane.xlu0 %423
    %v425 = vmul.f32 %v421, %v421
    %v426 = vsel %vm93, %v425, 0.0
    %427 = vadd.xlane.f32.xlu0 %v426
    %v428 = vpop.xlane.xlu0 %427
    %v429 = vmul.f32 %v424, 0.03125
    %v430 = vmul.f32 %v428, 0.03125
    %v431 = vmul.f32 %v429, %v429
    %v432 = vsub.f32 %v430, %v431
    %v433 = vmax.f32 %v432, 0.0
    %v434 = vsub.f32 %v421, %v429
    %v435 = vadd.f32 %v433, 1e-12
    %v436 = vrsqrt.pop %v435
    %v437 = vmul.f32 %v434, %v436
    %v438 = vmul.f32 %v437, %v191
    %v439 = vadd.f32 %v438, %v198
    %v441 = vsel %vm93, %v439, 0
    %443 = vmatprep.subr.mxu0 0.0
    %444 = vmatpush1.msra.mxu0 %v42
    %445 = vmatprep.subr.mxu0 0.0
    %446 = vmatpush1.msra.mxu0 %v43
    %447 = vmatprep.subr.mxu0 0.0
    %448 = vmatpush1.msra.mxu0 %v44
    %449 = vmatprep.subr.mxu0 0.0
    %450 = vmatpush1.msra.mxu0 %v45
    %451 = vmatprep.subr.mxu0 0.0
    %452 = vmatpush1.msra.mxu0 0.0
    %453 = vmatprep.subr.mxu0 0.0
    %454 = vmatpush1.msra.mxu0 0.0
    %455 = vmatprep.subr.mxu0 0.0
    %456 = vmatpush1.msra.mxu0 0.0
    %457 = vmatprep.subr.mxu0 0.0
    %458 = vmatpush1.msra.mxu0 0.0
    %459 = vmatprep.subr.mxu0 0.0
    %460 = vmatpush1.msra.mxu0 0.0
    %461 = vmatprep.subr.mxu0 0.0
    %462 = vmatpush1.msra.mxu0 0.0
    %463 = vmatprep.subr.mxu0 0.0
    %464 = vmatpush1.msra.mxu0 0.0
    %465 = vmatprep.subr.mxu0 0.0
    %466 = vmatpush1.msra.mxu0 0.0
    %467 = vmatprep.subr.mxu0 0.0
    %468 = vmatpush1.msra.mxu0 0.0
    %469 = vmatprep.subr.mxu0 0.0
    %470 = vmatpush1.msra.mxu0 0.0
    %471 = vmatprep.subr.mxu0 0.0
    %472 = vmatpush1.msra.mxu0 0.0
    %473 = vmatprep.subr.mxu0 0.0
    %474 = vmatpush1.msra.mxu0 0.0
    %475 = vmatprep.subr.mxu0 0.0
    %476 = vmatpush1.msra.mxu0 0.0
    %477 = vmatprep.subr.mxu0 0.0
    %478 = vmatpush1.msra.mxu0 0.0
    %479 = vmatprep.subr.mxu0 0.0
    %480 = vmatpush1.msra.mxu0 0.0
    %481 = vmatprep.subr.mxu0 0.0
    %482 = vmatpush1.msra.mxu0 0.0
    %483 = vmatprep.subr.mxu0 0.0
    %484 = vmatpush1.msra.mxu0 0.0
    %485 = vmatprep.subr.mxu0 0.0
    %486 = vmatpush1.msra.mxu0 0.0
    %487 = vmatprep.subr.mxu0 0.0
    %488 = vmatpush1.msra.mxu0 0.0
    %489 = vmatprep.subr.mxu0 0.0
    %490 = vmatpush1.msra.mxu0 0.0
    %491 = vmatprep.subr.mxu0 0.0
    %492 = vmatpush1.msra.mxu0 0.0
    %493 = vmatprep.subr.mxu0 0.0
    %494 = vmatpush1.msra.mxu0 0.0
    %495 = vmatprep.subr.mxu0 0.0
    %496 = vmatpush1.msra.mxu0 0.0
    %497 = vmatprep.subr.mxu0 0.0
    %498 = vmatpush1.msra.mxu0 0.0
    %499 = vmatprep.subr.mxu0 0.0
    %500 = vmatpush1.msra.mxu0 0.0
    %501 = vmatprep.subr.mxu0 0.0
    %502 = vmatpush1.msra.mxu0 0.0
    %503 = vmatprep.subr.mxu0 0.0
    %504 = vmatpush1.msra.mxu0 0.0
    %505 = vmatprep.subr.mxu0 0.0
    %506 = vmatpush1.msra.mxu0 0.0
    %507 = vmatprep.mubr.f32.mxu0 0.0
    %508 = vmatmul.mubr.f32.gmra.mrb[0].mxu0 %v441
    %v509 = vpop.f32.mrb[0].mxu0
    %v510 = vadd.f32 %v205, %v509
    %v511 = vpop.f32.mrb[0].mxu0
    %512 = vdwg.mxu0
    %513 = vxpose.xlu0.b32.start [1/16] %v510, 128
    %514 = vxpose.xlu0.b32.cont [2/16] 0.0, 128
    %515 = vxpose.xlu0.b32.cont [3/16] 0.0, 128
    %516 = vxpose.xlu0.b32.cont [4/16] 0.0, 128
    %517 = vxpose.xlu0.b32.cont [5/16] 0.0, 128
    %518 = vxpose.xlu0.b32.cont [6/16] 0.0, 128
    %519 = vxpose.xlu0.b32.cont [7/16] 0.0, 128
    %520 = vxpose.xlu0.b32.cont [8/16] 0.0, 128
    %521 = vxpose.xlu0.b32.cont [9/16] 0.0, 128
    %522 = vxpose.xlu0.b32.cont [10/16] 0.0, 128
    %523 = vxpose.xlu0.b32.cont [11/16] 0.0, 128
    %524 = vxpose.xlu0.b32.cont [12/16] 0.0, 128
    %525 = vxpose.xlu0.b32.cont [13/16] 0.0, 128
    %526 = vxpose.xlu0.b32.cont [14/16] 0.0, 128
    %527 = vxpose.xlu0.b32.cont [15/16] 0.0, 128
    %528 = vxpose.xlu0.b32.end [16/16] 0.0, 128
    %v529 = vpop.trf.xlu0
    %v530 = vpop.trf.xlu0
    %v531 = vpop.trf.xlu0
    %v532 = vpop.trf.xlu0
    %v533 = vpop.trf.xlu0
    %v534 = vpop.trf.xlu0
    %v535 = vpop.trf.xlu0
    %v536 = vpop.trf.xlu0
    %v537 = vpop.trf.xlu0
    %v538 = vpop.trf.xlu0
    %v539 = vpop.trf.xlu0
    %v540 = vpop.trf.xlu0
    %v541 = vpop.trf.xlu0
    %v542 = vpop.trf.xlu0
    %v543 = vpop.trf.xlu0
    %v544 = vpop.trf.xlu0
    %s545 = scalar_lea.vmem %s7, 16
    %546 = vst.msk [vmem:[%s545] sm:$0xff] %vm312, %v529
    %547 = vst.msk [vmem:[%s545 + $0x8] sm:$0xff] %vm312, %v530
    // Predicated region
    $region34: #{tpu_custom_call.1} parent=1 // pred_check
      _
    $region35: #{tpu_custom_call.1} parent=1 // pred_check_branch
      %549 = sbr.rel (0) target = $region37
    $region36: #{tpu_custom_call.1} parent=1 // pred_region
      _
    $region37: #{tpu_custom_call.1} parent=1 // pred_fallthru
      _
    // Predicated region
    $region38: #{tpu_custom_call.1} parent=1 // pred_check
      _
    $region39: #{tpu_custom_call.1} parent=1 // pred_check_branch
      %551 = sbr.rel (0) target = $region41
    $region40: #{tpu_custom_call.1} parent=1 // pred_region
      _
    $region41: #{tpu_custom_call.1} parent=1 // pred_fallthru
      _
    %552 = vsyncpa [#allocation3], 1

</llo_original>
